<compile_context>
chip_gen: v5e
topology: v5e:2x2
jax: 0.10.0
libtpu: 0.0.40
codegen_flags: <defaults>
</compile_context>

<pallas_src>
import functools

import jax
import jax.numpy as jnp
from jax import lax
from jax.experimental import pallas as pl
from jax.experimental.pallas import tpu as pltpu

_LANE = 128
_SUB = 8


def _focal_kernel(logits_ref, target_ref, alpha_ref, out_ref, *,
                  gamma, step_extent, valid_extent):
    """One (batch item, spatial tile) grid point.

    logits_ref : (1, C, rows, 128) or (1, C, cols)   class-major tile
    target_ref : (1, 1, rows, 128) or (1, 1, cols)   int targets
    alpha_ref  : (C, 1, 1) or (C, 1)                 per-class weights
    out_ref    : (1, 1, 8, 128)                      per-tile partial sum
    """
    s = pl.program_id(1)

    x = logits_ref[0].astype(jnp.float32)          # (C, *SP)
    t = target_ref[0].astype(jnp.int32)            # (1, *SP)
    alpha = alpha_ref[...].astype(jnp.float32)     # (C, 1[, 1])

    # Ragged-tail mask (the last spatial tile may hang past the array): mask
    # the raw logits/targets BEFORE max/exp so OOB garbage (possibly NaN)
    # cannot propagate.  Axis 1 of `t` is the tiled spatial axis in both
    # layouts (rows-of-128-lanes, or raw columns).
    pos = lax.broadcasted_iota(jnp.int32, t.shape, 1) + s * step_extent
    valid = pos < valid_extent                     # (1, *SP)
    x = jnp.where(valid, x, 0.0)
    t = jnp.where(valid, t, -1)

    # log-softmax pieces along the class axis.  Class is the MAJOR axis, so
    # these reductions are C-1 dense element-wise combines (VPU), no XLU.
    m = jnp.max(x, axis=0, keepdims=True)                              # (1,*SP)
    shifted = x - m                                                    # (C,*SP)
    lse = jnp.log(jnp.sum(jnp.exp(shifted), axis=0, keepdims=True))    # (1,*SP)

    cls = lax.broadcasted_iota(jnp.int32, x.shape, 0)                  # (C,*SP)
    onehot = (cls == t).astype(jnp.float32)                            # (C,*SP)

    logpt = jnp.sum(shifted * onehot, axis=0, keepdims=True) - lse     # (1,*SP)
    pt = jnp.exp(logpt)
    at = jnp.sum(alpha * onehot, axis=0, keepdims=True)                # (1,*SP)

    g = float(gamma)
    if g == 0.0:
        loss = -(logpt * at)
    else:
        omp = jnp.maximum(1.0 - pt, 0.0)           # guard rounding (pt > 1)
        if g.is_integer():                         # pure VPU, keeps EUP free
            focal = omp
            for _ in range(int(g) - 1):
                focal = focal * omp
        else:
            focal = omp ** g
        loss = -focal * (logpt * at)
    loss = jnp.where(valid, loss, 0.0)             # masked cols: at == 0 anyway

    # Per-(n, s) partial.  On the (1, rows, 128) path with rows % 8 == 0 the
    # reshape below is layout-preserving (each (8, 128) vreg tile becomes one
    # slab), so the reduction is rows/8 - 1 dense VPU adds -- no cross-lane
    # XLU reduce.  The wrapper finishes the (tiny) sum.
    if loss.ndim == 3 and loss.shape[1] % _SUB == 0:
        part = jnp.sum(loss.reshape(loss.shape[1] // _SUB, _SUB, _LANE), axis=0)
        out_ref[...] = part.reshape(1, 1, _SUB, _LANE)
    else:
        tot = jnp.sum(loss)
        r_i = lax.broadcasted_iota(jnp.int32, (1, 1, _SUB, _LANE), 2)
        c_i = lax.broadcasted_iota(jnp.int32, (1, 1, _SUB, _LANE), 3)
        out_ref[...] = jnp.where((r_i == 0) & (c_i == 0), tot, 0.0)


def focal_loss(logits, target, *, gamma=0.0, alpha=None, size_average=True,
               tile_f32_bytes=4 * 1024 * 1024, logits_buffers=None):
    """FocalLoss.forward equivalent.

    logits: (N, C, *spatial) or (N, C), float (f32 or bf16).
    target: (N, *spatial) or (N,), integer class ids.
    """
    if logits.ndim == 2:
        # Plain classification: softmax over classes per row; map rows to the
        # kernel's "spatial" axis (one small transpose copy, minor use case).
        n_rows, C = logits.shape
        x = jnp.transpose(logits, (1, 0))[None]            # (1, C, n_rows)
        t = target.reshape(1, n_rows)
        N, S = 1, n_rows
    else:
        N, C = logits.shape[0], logits.shape[1]
        S = 1
        for d in logits.shape[2:]:
            S *= d
        x = logits.reshape(N, C, S)                         # free view, NO transpose/pad
        t = target.reshape(N, S)

    # Keep narrow integer targets in their native dtype (cast in-kernel).
    if (not jnp.issubdtype(t.dtype, jnp.integer)) or t.dtype.itemsize > 4:
        t = t.astype(jnp.int32)

    # Replicate the module's alpha init (scalar -> [a, 1-a], list -> vector).
    if alpha is None:
        alpha_vec = jnp.ones((C,), jnp.float32)
    elif isinstance(alpha, (float, int)) and not isinstance(alpha, bool):
        alpha_vec = jnp.array([float(alpha), 1.0 - float(alpha)], jnp.float32)
    else:
        alpha_vec = jnp.asarray(alpha, jnp.float32).reshape(-1)
    if alpha_vec.shape[0] != C:
        raise ValueError(f"alpha has {alpha_vec.shape[0]} entries but C={C}")

    elems = N * S                                            # what the module averages over

    dense3d = (S % _LANE == 0) and S > 0
    if dense3d:
        # (N, C, R, 128) layout: sublane+lane dense tiles, masked by rows.
        R = S // _LANE
        x = x.reshape(N, C, R, _LANE)                        # free reshape
        t = t.reshape(N, 1, R, _LANE)                        # free reshape
        a = alpha_vec.reshape(C, 1, 1)
        desired = max(_SUB, (tile_f32_bytes // (C * _LANE * 4) // _SUB) * _SUB)
        rows = R if R <= desired else desired
        num_s = pl.cdiv(R, rows)
        step_extent, valid_extent = rows, R
        tile_elems = rows * _LANE
        log_block = (1, C, rows, _LANE)
        tgt_block = (1, 1, rows, _LANE)
        a_block = (C, 1, 1)
        log_map = lambda n, s: (n, 0, s, 0)
        tgt_map = lambda n, s: (n, 0, s, 0)
        a_map = lambda n, s: (0, 0, 0)
    else:
        # Fallback: (C, cols) tiles with lane masking of the ragged tail.
        t = t.reshape(N, 1, S)
        a = alpha_vec.reshape(C, 1)
        desired = max(_LANE, (tile_f32_bytes // (C * 4) // _LANE) * _LANE)
        cols = S if S <= desired else desired
        num_s = pl.cdiv(S, cols)
        step_extent, valid_extent = cols, S
        tile_elems = cols
        log_block = (1, C, cols)
        tgt_block = (1, 1, cols)
        a_block = (C, 1)
        log_map = lambda n, s: (n, 0, s)
        tgt_map = lambda n, s: (n, 0, s)
        a_map = lambda n, s: (0, 0)

    # Scoped-VMEM budget: 2 pipelined buffers per input + a few f32 temps.
    log_blk_bytes = C * tile_elems * x.dtype.itemsize
    tgt_blk_bytes = tile_elems * t.dtype.itemsize
    f32_blk_bytes = C * tile_elems * 4
    est = 2 * log_blk_bytes + 2 * tgt_blk_bytes + 8 * f32_blk_bytes + (2 << 20)
    vmem_limit = int(min(64 << 20, max(32 << 20, est)))

    if logits_buffers is None:
        logits_spec = pl.BlockSpec(log_block, log_map)
    else:  # optional knob to sweep pipeline depth on the dominant stream
        logits_spec = pl.BlockSpec(log_block, log_map,
                                   pipeline_mode=pl.Buffered(int(logits_buffers)))

    kernel = functools.partial(_focal_kernel, gamma=float(gamma),
                               step_extent=step_extent,
                               valid_extent=valid_extent)

    partials = pl.pallas_call(
        kernel,
        out_shape=jax.ShapeDtypeStruct((N, num_s, _SUB, _LANE), jnp.float32),
        grid_spec=pltpu.PrefetchScalarGridSpec(
            num_scalar_prefetch=0,
            grid=(N, num_s),
            in_specs=[
                logits_spec,
                pl.BlockSpec(tgt_block, tgt_map),
                pl.BlockSpec(a_block, a_map),
            ],
            out_specs=pl.BlockSpec((1, 1, _SUB, _LANE), lambda n, s: (n, s, 0, 0)),
        ),
        compiler_params=pltpu.CompilerParams(
            dimension_semantics=("parallel", "parallel"),
            vmem_limit_bytes=vmem_limit),
    )(x, t, a)

    total = jnp.sum(partials)                                # tiny reduce
    if size_average:
        return total / jnp.float32(elems)
    return total


def _ref_focal(logits, target, gamma, alpha, size_average):
    """Pure-JAX mirror of the PyTorch module's forward."""
    x = jnp.asarray(logits, jnp.float32)
    if x.ndim > 2:
        Nn, Cc = x.shape[0], x.shape[1]
        x = x.reshape(Nn, Cc, -1).transpose(0, 2, 1).reshape(-1, Cc)
    C = x.shape[-1]
    tgt = target.reshape(-1).astype(jnp.int32)
    logsm = jax.nn.log_softmax(x, axis=-1)
    logpt = jnp.take_along_axis(logsm, tgt[:, None], axis=1)[:, 0]
    pt = jnp.exp(logpt)
    if alpha is not None:
        if isinstance(alpha, (float, int)) and not isinstance(alpha, bool):
            avec = jnp.array([float(alpha), 1.0 - float(alpha)], jnp.float32)
        else:
            avec = jnp.asarray(alpha, jnp.float32)
        logpt = logpt * avec[tgt]
    loss = -1.0 * (1.0 - pt) ** gamma * logpt
    return loss.mean() if size_average else loss.sum()


if __name__ == "__main__":
    root = jax.random.PRNGKey(0)

    def run_case(i, shape, gamma, alpha, size_average, dtype=jnp.float32,
                 tile_f32_bytes=4 * 1024 * 1024, rtol=2e-4, atol=1e-4):
        k1, k2 = jax.random.split(jax.random.fold_in(root, i))
        C = shape[1]
        x = jax.random.normal(k1, shape, dtype=jnp.float32).astype(dtype)
        tgt_shape = (shape[0],) + tuple(shape[2:]) if len(shape) > 2 else (shape[0],)
        t = jax.random.randint(k2, tgt_shape, 0, C, dtype=jnp.int32)
        out = focal_loss(x, t, gamma=gamma, alpha=alpha, size_average=size_average,
                         tile_f32_bytes=tile_f32_bytes)
        jax.block_until_ready(out)
        ref = _ref_focal(x, t, gamma, alpha, size_average)
        assert jnp.allclose(out, ref, rtol=rtol, atol=atol), (i, out, ref)

    # 1) Original demo config: NCHW, gamma=2, per-class alpha, mean.
    run_case(1, (2, 4, 16, 16), 2.0, [0.25, 0.75, 0.5, 0.5], True)
    # 2) Module defaults: gamma=0, no alpha, sum reduction.
    run_case(2, (2, 4, 16, 16), 0.0, None, False)
    # 3) S % 1024 == 0: dense (8,128)-partial epilogue path, bf16 logits.
    run_case(3, (2, 4, 32, 32), 2.0, None, True,
             dtype=jnp.bfloat16, rtol=1e-3, atol=1e-3)
    # 4) Ragged row tile on the 3-D path (R=12, rows=8 -> masked tail rows),
    #    non-integer gamma, N=1 (second TC still usable via parallel s-axis).
    run_case(4, (1, 4, 32, 48), 1.5, [0.1, 0.2, 0.3, 0.4], True,
             tile_f32_bytes=4096)
    # 5) S not a multiple of 128: 2-D fallback path with a forced ragged tile.
    run_case(5, (2, 3, 15, 15), 2.0, None, False, tile_f32_bytes=2048)
    # 6) 2-D logits input with scalar alpha (module's [a, 1-a] init, C == 2).
    run_case(6, (8, 2), 2.0, 0.25, True)

    print("KERNEL_OK")
</pallas_src>

<mosaic_0001>
module attributes {stable_mosaic.version = 11 : i64} {
  func.func @_focal_kernel(%arg0: i32, %arg1: i32, %arg2: memref<1x4x2x128xf32, #tpu.memory_space<vmem>>, %arg3: memref<1x1x2x128xi32, #tpu.memory_space<vmem>>, %arg4: memref<4x1x1xf32, #tpu.memory_space<vmem>>, %arg5: memref<1x1x8x128xf32, #tpu.memory_space<vmem>>) attributes {dimension_semantics = [#tpu.dimension_semantics<parallel>, #tpu.dimension_semantics<parallel>], iteration_bounds = array<i64: 2, 1>, scalar_prefetch = 0 : i64, scratch_operands = 0 : i64, tpu.core_type = #tpu.core_type<tc>, window_params = [{transform_indices = @transform_0, window_bounds = array<i64: 1, 4, 2, 128>}, {transform_indices = @transform_1, window_bounds = array<i64: 1, 1, 2, 128>}, {pipeline_mode = #tpu.pipeline_mode<synchronous>, transform_indices = @transform_2, window_bounds = array<i64: 4, 1, 1>}, {transform_indices = @transform_3, window_bounds = array<i64: 1, 1, 8, 128>}]} {
    %c0 = arith.constant 0 : index
    %c0_0 = arith.constant 0 : index
    %c0_1 = arith.constant 0 : index
    %c0_2 = arith.constant 0 : index
    %0 = vector.load %arg2[%c0, %c0_0, %c0_1, %c0_2] : memref<1x4x2x128xf32, #tpu.memory_space<vmem>>, vector<1x4x2x128xf32>
    %1 = vector.shape_cast %0 : vector<1x4x2x128xf32> to vector<4x2x128xf32>
    %c0_3 = arith.constant 0 : index
    %c0_4 = arith.constant 0 : index
    %c0_5 = arith.constant 0 : index
    %c0_6 = arith.constant 0 : index
    %2 = vector.load %arg3[%c0_3, %c0_4, %c0_5, %c0_6] : memref<1x1x2x128xi32, #tpu.memory_space<vmem>>, vector<1x1x2x128xi32>
    %3 = vector.shape_cast %2 : vector<1x1x2x128xi32> to vector<1x2x128xi32>
    %c0_7 = arith.constant 0 : index
    %c0_8 = arith.constant 0 : index
    %c0_9 = arith.constant 0 : index
    %4 = vector.load %arg4[%c0_7, %c0_8, %c0_9] : memref<4x1x1xf32, #tpu.memory_space<vmem>>, vector<4x1x1xf32>
    %5 = tpu.iota {dimensions = array<i32: 1>} : vector<1x2x128xi32>
    %c2_i32 = arith.constant 2 : i32
    %6 = arith.muli %arg1, %c2_i32 : i32
    %7 = vector.broadcast %6 : i32 to vector<1x2x128xi32>
    %8 = arith.addi %5, %7 : vector<1x2x128xi32>
    %c2_i32_10 = arith.constant 2 : i32
    %9 = vector.broadcast %c2_i32_10 : i32 to vector<1x2x128xi32>
    %10 = arith.cmpi slt, %8, %9 : vector<1x2x128xi32>
    %cst = arith.constant 0.000000e+00 : f32
    %11 = vector.shape_cast %10 : vector<1x2x128xi1> to vector<1x2x128xi1>
    %12 = vector.broadcast %11 : vector<1x2x128xi1> to vector<4x2x128xi1>
    %13 = vector.broadcast %cst : f32 to vector<4x2x128xf32>
    %14 = arith.select %12, %1, %13 : vector<4x2x128xi1>, vector<4x2x128xf32>
    %c-1_i32 = arith.constant -1 : i32
    %15 = vector.broadcast %c-1_i32 : i32 to vector<1x2x128xi32>
    %16 = arith.select %10, %3, %15 : vector<1x2x128xi1>, vector<1x2x128xi32>
    %cst_11 = arith.constant dense<0xFF800000> : vector<2x128xf32>
    %17 = vector.multi_reduction <maximumf>, %14, %cst_11 [0] : vector<4x2x128xf32> to vector<2x128xf32>
    %18 = vector.shape_cast %17 : vector<2x128xf32> to vector<1x2x128xf32>
    %19 = vector.broadcast %18 : vector<1x2x128xf32> to vector<4x2x128xf32>
    %20 = arith.subf %14, %19 : vector<4x2x128xf32>
    %21 = math.exp %20 : vector<4x2x128xf32>
    %cst_12 = arith.constant dense<0.000000e+00> : vector<2x128xf32>
    %22 = vector.multi_reduction <add>, %21, %cst_12 [0] : vector<4x2x128xf32> to vector<2x128xf32>
    %23 = vector.shape_cast %22 : vector<2x128xf32> to vector<1x2x128xf32>
    %24 = math.log %23 : vector<1x2x128xf32>
    %25 = tpu.iota {dimensions = array<i32: 0>} : vector<4x2x128xi32>
    %26 = vector.broadcast %16 : vector<1x2x128xi32> to vector<4x2x128xi32>
    %27 = arith.cmpi eq, %25, %26 : vector<4x2x128xi32>
    %28 = arith.extui %27 : vector<4x2x128xi1> to vector<4x2x128xi32>
    %29 = arith.sitofp %28 : vector<4x2x128xi32> to vector<4x2x128xf32>
    %30 = arith.mulf %20, %29 : vector<4x2x128xf32>
    %cst_13 = arith.constant dense<0.000000e+00> : vector<2x128xf32>
    %31 = vector.multi_reduction <add>, %30, %cst_13 [0] : vector<4x2x128xf32> to vector<2x128xf32>
    %32 = vector.shape_cast %31 : vector<2x128xf32> to vector<1x2x128xf32>
    %33 = arith.subf %32, %24 : vector<1x2x128xf32>
    %34 = math.exp %33 : vector<1x2x128xf32>
    %35 = vector.broadcast %4 : vector<4x1x1xf32> to vector<4x2x128xf32>
    %36 = arith.mulf %35, %29 : vector<4x2x128xf32>
    %cst_14 = arith.constant dense<0.000000e+00> : vector<2x128xf32>
    %37 = vector.multi_reduction <add>, %36, %cst_14 [0] : vector<4x2x128xf32> to vector<2x128xf32>
    %38 = vector.shape_cast %37 : vector<2x128xf32> to vector<1x2x128xf32>
    %cst_15 = arith.constant 1.000000e+00 : f32
    %39 = vector.broadcast %cst_15 : f32 to vector<1x2x128xf32>
    %40 = arith.subf %39, %34 : vector<1x2x128xf32>
    %cst_16 = arith.constant 0.000000e+00 : f32
    %41 = vector.broadcast %cst_16 : f32 to vector<1x2x128xf32>
    %42 = arith.maximumf %40, %41 : vector<1x2x128xf32>
    %43 = arith.mulf %42, %42 : vector<1x2x128xf32>
    %cst_17 = arith.constant 0.000000e+00 : f32
    %44 = vector.broadcast %cst_17 : f32 to vector<1x2x128xf32>
    %45 = arith.subf %44, %43 : vector<1x2x128xf32>
    %46 = arith.mulf %33, %38 : vector<1x2x128xf32>
    %47 = arith.mulf %45, %46 : vector<1x2x128xf32>
    %cst_18 = arith.constant 0.000000e+00 : f32
    %48 = vector.broadcast %cst_18 : f32 to vector<1x2x128xf32>
    %49 = arith.select %10, %47, %48 : vector<1x2x128xi1>, vector<1x2x128xf32>
    %50 = vector.shape_cast %49 : vector<1x2x128xf32> to vector<1x1x2x128xf32>
    %cst_19 = arith.constant dense<0.000000e+00> : vector<1xf32>
    %51 = vector.multi_reduction <add>, %50, %cst_19 [1, 2, 3] : vector<1x1x2x128xf32> to vector<1xf32>
    %52 = vector.shape_cast %51 : vector<1xf32> to vector<1x1x1x1xf32>
    %53 = vector.extract %52[0, 0, 0, 0] : f32 from vector<1x1x1x1xf32>
    %54 = tpu.iota {dimensions = array<i32: 2>} : vector<1x1x8x128xi32>
    %55 = tpu.iota {dimensions = array<i32: 3>} : vector<1x1x8x128xi32>
    %c0_i32 = arith.constant 0 : i32
    %56 = vector.broadcast %c0_i32 : i32 to vector<1x1x8x128xi32>
    %57 = arith.cmpi eq, %54, %56 : vector<1x1x8x128xi32>
    %c0_i32_20 = arith.constant 0 : i32
    %58 = vector.broadcast %c0_i32_20 : i32 to vector<1x1x8x128xi32>
    %59 = arith.cmpi eq, %55, %58 : vector<1x1x8x128xi32>
    %60 = arith.andi %57, %59 : vector<1x1x8x128xi1>
    %cst_21 = arith.constant 0.000000e+00 : f32
    %61 = vector.broadcast %53 : f32 to vector<1x1x8x128xf32>
    %62 = vector.broadcast %cst_21 : f32 to vector<1x1x8x128xf32>
    %63 = arith.select %60, %61, %62 : vector<1x1x8x128xi1>, vector<1x1x8x128xf32>
    %c0_22 = arith.constant 0 : index
    %c0_23 = arith.constant 0 : index
    %c0_24 = arith.constant 0 : index
    %c0_25 = arith.constant 0 : index
    %64 = vector.load %arg5[%c0_22, %c0_23, %c0_24, %c0_25] : memref<1x1x8x128xf32, #tpu.memory_space<vmem>>, vector<1x1x8x128xf32>
    tpu.vector_store %arg5[%c0_22, %c0_23, %c0_24, %c0_25], %63 {strides = array<i32>} : memref<1x1x8x128xf32, #tpu.memory_space<vmem>>, vector<1x1x8x128xf32>,
    return
  }
  func.func @transform_0(%arg0: i32, %arg1: i32) -> (i32, i32, i32, i32) {
    %c0_i32 = arith.constant 0 : i32
    %c0_i32_0 = arith.constant 0 : i32
    %c0_i32_1 = arith.constant 0 : i32
    return %arg0, %c0_i32, %arg1, %c0_i32_0 : i32, i32, i32, i32
  }
  func.func @transform_1(%arg0: i32, %arg1: i32) -> (i32, i32, i32, i32) {
    %c0_i32 = arith.constant 0 : i32
    %c0_i32_0 = arith.constant 0 : i32
    %c0_i32_1 = arith.constant 0 : i32
    return %arg0, %c0_i32, %arg1, %c0_i32_0 : i32, i32, i32, i32
  }
  func.func @transform_2(%arg0: i32, %arg1: i32) -> (i32, i32, i32) {
    %c0_i32 = arith.constant 0 : i32
    %c0_i32_0 = arith.constant 0 : i32
    %c0_i32_1 = arith.constant 0 : i32
    %c0_i32_2 = arith.constant 0 : i32
    return %c0_i32, %c0_i32_0, %c0_i32_1 : i32, i32, i32
  }
  func.func @transform_3(%arg0: i32, %arg1: i32) -> (i32, i32, i32, i32) {
    %c0_i32 = arith.constant 0 : i32
    %c0_i32_0 = arith.constant 0 : i32
    %c0_i32_1 = arith.constant 0 : i32
    return %arg0, %arg1, %c0_i32, %c0_i32_0 : i32, i32, i32, i32
  }
}

</mosaic_0001>

<llo_original>
// kernel: tpu_custom_call.1
$region0: #{tpu_custom_call.1}
  #allocation0 [shape = 'u32[]', space=smem, size = 0x4, offset = 0x4, fixed_abs, tag = 'smem constant byte address 0x4 - core index']
  #allocation1 [shape = 'u32[72,128]{1,0:T(1,128)}', space=vmem, size = 0x9000, scoped, tag = 'internal scratch']
  %s0 = inlined_call_operand.hbm [shape: f32[2,4,2,128], index: 0, kind: input, shape index: {}]
  %s1 = inlined_call_operand.vmem [shape: s32[2,1,2,128], index: 1, kind: input, shape index: {}]
  %s2 = inlined_call_operand.vmem [shape: f32[4,1,1], index: 2, kind: input, shape index: {}]
  %s3 = inlined_call_operand.hbm [shape: f32[2,1,8,128], index: 3, kind: output, shape index: {}]
  %s4 = sld [smem:[#allocation0]]
  $region49: #{tpu_custom_call.1} parent=0
    _
  %s6 = ssub.s32 1, %s4
  %s7 = scalar_select 0, %s6, %s4
  $region1: #{tpu_custom_call.1} parent=0
    #allocation2 [shape = 'u8[8192]{0}', space=vmem, size = 0x2000, scoped, tag = 'input window, operand 0']
    #allocation3 [shape = 's32[2]{0}', space=sflag, size = 0x8, scoped, tag = 'scoped memory for tpu_custom_call.1']
    #allocation4 [shape = 's32[2]{0}', space=sflag, size = 0x8, scoped, tag = 'scoped memory for tpu_custom_call.1']
    #allocation5 [shape = 'u8[8192]{0}', space=vmem, size = 0x2000, scoped, tag = 'output window, operand 0']
    %8 = vsyncpa [#allocation3], 0
    %s9 = scalar_lea.sflag [#allocation3], 1
    %10 = vsyncpa %s9, 0
    %11 = vsyncpa [#allocation4], 0
    %s12 = scalar_lea.sflag [#allocation4], 1
    %13 = vsyncpa %s12, 0
    loop: start=0, step=1, limit=4
    $region2: #{tpu_custom_call.1} parent=1 // loop_pre_header
      _
    $region3: #{tpu_custom_call.1} parent=1 // loop_header
      %s15 = sphi 0, %s19
      %p16 = scmp.ge.s32.totalorder %s15, 4
      %s22 = sphi 0, %s34
      %s23 = sphi 0, %s30
      %s24 = sphi 0, %s22
      %s25 = sphi 0, %s23
      %s26 = sphi 0, %s24
      %s27 = sphi 0, %s25
      %s39 = sphi 0, %s41
      %s42 = sphi 0, %s39
      %s43 = sphi 0, %s42
      %s59 = sphi 0, %s43
      %s67 = sphi 0, %s69
      %s70 = sphi 0, %s67
      %s71 = sphi 0, %s70
      %s87 = sphi 0, %s71
      %s91 = sphi 0, %s91
      %s93 = sphi 0, %s91
      %s94 = sphi 0, %s93
      %s108 = sphi 0, %s94
      %s116 = sphi 0, %s118
      %s119 = sphi 0, %s116
      %s120 = sphi 0, %s119
      %s136 = sphi 0, %s120
    $region4: #{tpu_custom_call.1} parent=1 // loop_header_branch
      %18 = sbr.rel (%p16) target = $region8
    $region5: #{tpu_custom_call.1} parent=1 // loop_body
      %s20 = ssub.s32 %s15, 1
      %s21 = ssub.s32 %s15, 2
      %s28 = sadd.s32 1, %s23
      %p29 = scmp.ge.s32.totalorder %s28, 1
      %s30 = scalar_select %p29, 0, %s28
      %s31 = sadd.s32 1, %s22
      %s32 = scalar_select %p29, %s31, %s22
      %p33 = scmp.ge.s32.totalorder %s32, 2
      %s34 = scalar_select %p33, 0, %s32
      %s35 = ssub.s32 %s22, %s34
      %s36 = ssub.s32 %s23, %s30
      %s37 = sor.u32 %s35, %s36
      %p38 = scmp.eq.s32.totalorder %s37, 0
      %s40 = sadd.s32 %s39, 1
      %s41 = scalar_select %p38, %s39, %s40
      %p44 = pneg %p38
      %p45 = scmp.eq.s32.totalorder %s15, 1
      %p46 = por %p44, %p45
      %p47 = scmp.ne.s32.totalorder %s39, %s42
      %p48 = scmp.eq.s32.totalorder %s15, 0
      %p49 = por %p47, %p48
      %p50 = scmp.ne.s32.totalorder %s39, %s42
      %p51 = scmp.eq.s32.totalorder %s20, 1
      %p52 = por %p50, %p51
      %p53 = scmp.ne.s32.totalorder %s42, %s43
      %p54 = scmp.eq.s32.totalorder %s20, 0
      %p55 = por %p53, %p54
      %p56 = scmp.ne.s32.totalorder %s42, %s43
      %p57 = scmp.eq.s32.totalorder %s21, 1
      %p58 = por %p56, %p57
      %p60 = scmp.ne.s32.totalorder %s43, %s59
      %p61 = scmp.eq.s32.totalorder %s21, 0
      %p62 = por %p60, %p61
      %s63 = ssub.s32 %s22, %s34
      %s64 = ssub.s32 %s23, %s30
      %s65 = sor.u32 %s63, %s64
      %p66 = scmp.eq.s32.totalorder %s65, 0
      %s68 = sadd.s32 %s67, 1
      %s69 = scalar_select %p66, %s67, %s68
      %p72 = pneg %p66
      %p73 = scmp.eq.s32.totalorder %s15, 1
      %p74 = por %p72, %p73
      %p75 = scmp.ne.s32.totalorder %s67, %s70
      %p76 = scmp.eq.s32.totalorder %s15, 0
      %p77 = por %p75, %p76
      %p78 = scmp.ne.s32.totalorder %s67, %s70
      %p79 = scmp.eq.s32.totalorder %s20, 1
      %p80 = por %p78, %p79
      %p81 = scmp.ne.s32.totalorder %s70, %s71
      %p82 = scmp.eq.s32.totalorder %s20, 0
      %p83 = por %p81, %p82
      %p84 = scmp.ne.s32.totalorder %s70, %s71
      %p85 = scmp.eq.s32.totalorder %s21, 1
      %p86 = por %p84, %p85
      %p88 = scmp.ne.s32.totalorder %s71, %s87
      %p89 = scmp.eq.s32.totalorder %s21, 0
      %p90 = por %p88, %p89
      %s92 = sadd.s32 %s91, 1
      %p95 = scmp.eq.s32.totalorder %s15, 1
      %p96 = scmp.ne.s32.totalorder %s91, %s93
      %p97 = scmp.eq.s32.totalorder %s15, 0
      %p98 = por %p96, %p97
      %p99 = scmp.ne.s32.totalorder %s91, %s93
      %p100 = scmp.eq.s32.totalorder %s20, 1
      %p101 = por %p99, %p100
      %p102 = scmp.ne.s32.totalorder %s93, %s94
      %p103 = scmp.eq.s32.totalorder %s20, 0
      %p104 = por %p102, %p103
      %p105 = scmp.ne.s32.totalorder %s93, %s94
      %p106 = scmp.eq.s32.totalorder %s21, 1
      %p107 = por %p105, %p106
      %p109 = scmp.ne.s32.totalorder %s94, %s108
      %p110 = scmp.eq.s32.totalorder %s21, 0
      %p111 = por %p109, %p110
      %s112 = ssub.s32 %s22, %s34
      %s113 = ssub.s32 %s23, %s30
      %s114 = sor.u32 %s112, %s113
      %p115 = scmp.eq.s32.totalorder %s114, 0
      %s117 = sadd.s32 %s116, 1
      %s118 = scalar_select %p115, %s116, %s117
      %p121 = pneg %p115
      %p122 = scmp.eq.s32.totalorder %s15, 1
      %p123 = por %p121, %p122
      %p124 = scmp.ne.s32.totalorder %s116, %s119
      %p125 = scmp.eq.s32.totalorder %s15, 0
      %p126 = por %p124, %p125
      %p127 = scmp.ne.s32.totalorder %s116, %s119
      %p128 = scmp.eq.s32.totalorder %s20, 1
      %p129 = por %p127, %p128
      %p130 = scmp.ne.s32.totalorder %s119, %s120
      %p131 = scmp.eq.s32.totalorder %s20, 0
      %p132 = por %p130, %p131
      %p133 = scmp.ne.s32.totalorder %s119, %s120
      %p134 = scmp.eq.s32.totalorder %s21, 1
      %p135 = por %p133, %p134
      %p137 = scmp.ne.s32.totalorder %s120, %s136
      %p138 = scmp.eq.s32.totalorder %s21, 0
      %p139 = por %p137, %p138
      %p140 = scmp.le.s32.totalorder 1, %s15
      %p141 = scmp.lt.s32.totalorder %s15, 3
      %p142 = pnand %p140, %p141
      %p143 = pneg %p142
      // Predicated region
      $region9: #{tpu_custom_call.1} parent=5 // pred_check
        _
      $region10: #{tpu_custom_call.1} parent=5 // pred_check_branch
        %145 = sbr.rel (%p142) target = $region12
      $region11: #{tpu_custom_call.1} parent=5 // pred_region
        %s146 = ssub.s32 %s15, 1
        // Predicated region
        $region13: #{tpu_custom_call.1} parent=11 // pred_check
          %p147 = pneg %p104
        $region14: #{tpu_custom_call.1} parent=11 // pred_check_branch
          %149 = sbr.rel (%p147) target = $region16
        $region15: #{tpu_custom_call.1} parent=11 // pred_region
          _
        $region16: #{tpu_custom_call.1} parent=11 // pred_fallthru
          _
      $region12: #{tpu_custom_call.1} parent=5 // pred_fallthru
        _
      %p150 = scmp.lt.s32.totalorder %s15, 2
      // Predicated region
      $region17: #{tpu_custom_call.1} parent=5 // pred_check
        %p151 = pneg %p150
      $region18: #{tpu_custom_call.1} parent=5 // pred_check_branch
        %153 = sbr.rel (%p151) target = $region20
      $region19: #{tpu_custom_call.1} parent=5 // pred_region
        // Predicated region
        $region21: #{tpu_custom_call.1} parent=19 // pred_check
          %p154 = pneg %p49
        $region22: #{tpu_custom_call.1} parent=19 // pred_check_branch
          %156 = sbr.rel (%p154) target = $region24
        $region23: #{tpu_custom_call.1} parent=19 // pred_region
          %s157 = sand.u32 %s39, 1
          %s158 = scalar_lea.sflag [#allocation3], %s157
          %s159 = sand.u32 %s39, 1
          %s160 = smul.addr %s159, 8
          %s161 = scalar_lea.vmem [#allocation2], %s160
          %163 = vsyncadd %s158, 0
          %s164 = smul.addr %s22, 4
          %s165 = sadd.s32 %s23, %s164
          %s166 = smul.addr %s165, 2
          %s167 = scalar_lea.hbm %s0, %s166
          %s168 = sshll.u32 %s167, 4
          %s169 = int_to_ptr.hbm [resolvable:$true] %s168
          %s170 = sshll.u32 %s161, 4
          %s171 = int_to_ptr.vmem [resolvable:$true] %s170
          %176 = dma.hbm_to_vmem [thread:$0]  %s169, 128, %s171, %s158, 32, 32, 2
        $region24: #{tpu_custom_call.1} parent=19 // pred_fallthru
          _
        // Predicated region
        $region25: #{tpu_custom_call.1} parent=19 // pred_check
          %p177 = pneg %p77
        $region26: #{tpu_custom_call.1} parent=19 // pred_check_branch
          %179 = sbr.rel (%p177) target = $region28
        $region27: #{tpu_custom_call.1} parent=19 // pred_region
          %p180 = scmp.lt.s32.totalorder %s22, 1
          %s181 = scalar_select %p180, %s22, 1
          %p182 = scmp.lt.s32.totalorder %s23, 0
          %s183 = scalar_select %p182, %s23, 0
          %s184 = sadd.s32 %s183, %s181
          %s185 = smul.addr %s184, 2
          %s186 = scalar_lea.vmem %s1, %s185
        $region28: #{tpu_custom_call.1} parent=19 // pred_fallthru
          _
      $region20: #{tpu_custom_call.1} parent=5 // pred_fallthru
        _
      %p187 = scmp.le.s32.totalorder 1, %s15
      %p188 = scmp.lt.s32.totalorder %s15, 3
      %p189 = pnand %p187, %p188
      %p190 = pneg %p189
      // Predicated region
      $region29: #{tpu_custom_call.1} parent=5 // pred_check
        _
      $region30: #{tpu_custom_call.1} parent=5 // pred_check_branch
        %192 = sbr.rel (%p189) target = $region32
      $region31: #{tpu_custom_call.1} parent=5 // pred_region
        %s193 = ssub.s32 %s15, 1
        %s194 = sand.u32 %s42, 1
        %s195 = scalar_lea.sflag [#allocation3], %s194
        %s196 = sand.u32 %s42, 1
        %s197 = smul.addr %s196, 8
        %s198 = scalar_lea.vmem [#allocation2], %s197
        // Predicated region
        $region33: #{tpu_custom_call.1} parent=31 // pred_check
          %p199 = pneg %p55
        $region34: #{tpu_custom_call.1} parent=31 // pred_check_branch
          %201 = sbr.rel (%p199) target = $region36
        $region35: #{tpu_custom_call.1} parent=31 // pred_region
          %203 = dma.done %s195, 128
        $region36: #{tpu_custom_call.1} parent=31 // pred_fallthru
          _
        %s204 = sand.u32 %s42, 1
        %s205 = scalar_lea.sflag [#allocation3], %s204
        %s206 = sand.u32 %s42, 1
        %s207 = smul.addr %s206, 8
        %s208 = scalar_lea.vmem [#allocation2], %s207
        %p209 = pneg %p55
        %p210 = pneg %p52
        %p211 = scmp.lt.s32.totalorder %s24, 1
        %s212 = scalar_select %p211, %s24, 1
        %p213 = scmp.lt.s32.totalorder %s25, 0
        %s214 = scalar_select %p213, %s25, 0
        %s215 = sadd.s32 %s214, %s212
        %s216 = smul.addr %s215, 2
        %s217 = scalar_lea.vmem %s1, %s216
        %p218 = pneg %p83
        %p219 = pneg %p80
        %p220 = pneg %p104
        %p221 = pneg %p101
        %p222 = pneg %p132
        %p223 = pneg %p129
        %s224 = sand.u32 %s119, 1
        %s225 = scalar_lea.sflag [#allocation4], %s224
        %s226 = sand.u32 %s119, 1
        %s227 = smul.addr %s226, 8
        %s228 = scalar_lea.vmem [#allocation5], %s227
        %p229 = scmp.lt.s32.totalorder %s24, 1
        %s230 = scalar_select %p229, %s24, 1
        %p231 = scmp.lt.s32.totalorder %s25, 0
        %s232 = scalar_select %p231, %s25, 0
        %s233 = sadd.s32 %s232, %s230
        %s234 = smul.addr %s233, 2
        %s235 = scalar_lea.vmem %s1, %s234
        %v236 = vld [vmem:[%s198] sm:$0x3]
        %v237 = vld [vmem:[%s198 + $0x2] sm:$0x3]
        %v238 = vld [vmem:[%s198 + $0x4] sm:$0x3]
        %v239 = vld [vmem:[%s198 + $0x6] sm:$0x3]
        %v240 = vld [vmem:[%s235] sm:$0x3]
        %v241 = vld [vmem:[%s2] sm:$0x1]
        %v242 = vld [vmem:[%s2 + $0x1] sm:$0x1]
        %v243 = vld [vmem:[%s2 + $0x2] sm:$0x1]
        %v244 = vld [vmem:[%s2 + $0x3] sm:$0x1]
        %v245 = vlaneseq
        %v246 = vshrl.u32 %v245, 7
        %s247 = smul.u32 %s25, 2
        %v248 = vstv %s247
        %v249 = vadd.s32 %v246, %v248
        %vm250 = vcmp.lt.s32.totalorder %v249, 2
        %v251 = vsel %vm250, 1, 0
        %vm252 = vcmp.eq.s32.totalorder %v251, 1
        %v253 = vsel %vm252, %v236, 0.0
        %v254 = vsel %vm252, %v237, 0.0
        %v255 = vsel %vm252, %v238, 0.0
        %v256 = vsel %vm252, %v239, 0.0
        %v257 = vsel %vm250, %v240, 4294967295
        %vm258 = vcmask 1041408
        %v259 = vsel %vm258, %v253, -inf
        %v260 = vsel %vm258, %v254, -inf
        %v261 = vsel %vm258, %v255, -inf
        %v262 = vsel %vm258, %v256, -inf
        %v263 = vmax.f32 %v259, %v260
        %v264 = vmax.f32 %v261, %v262
        %v265 = vmax.f32 %v263, %v264
        %v266 = vsub.f32 %v253, %v265
        %v267 = vsub.f32 %v254, %v265
        %v268 = vsub.f32 %v255, %v265
        %v269 = vsub.f32 %v256, %v265
        %v270 = vmul.f32 %v266, 1.442695
        %v271 = vpow.pop %v270
        %v272 = vmul.f32 %v267, 1.442695
        %v273 = vpow.pop %v272
        %v274 = vmul.f32 %v268, 1.442695
        %v275 = vpow.pop %v274
        %v276 = vmul.f32 %v269, 1.442695
        %v277 = vpow.pop %v276
        %v278 = vsel %vm258, %v271, 0.0
        %v279 = vsel %vm258, %v273, 0.0
        %v280 = vadd.f32 %v278, %v279
        %v281 = vsel %vm258, %v275, 0.0
        %v282 = vadd.f32 %v280, %v281
        %v283 = vsel %vm258, %v277, 0.0
        %v284 = vadd.f32 %v282, %v283
        %v285 = vlog2.pop %v284
        %v286 = vmul.f32 %v285, 0.6931472
        %vm287 = vcmp.eq.s32.totalorder %v257, 0
        %vm288 = vcmp.eq.s32.totalorder %v257, 1
        %vm289 = vcmp.eq.s32.totalorder %v257, 2
        %vm290 = vcmp.eq.s32.totalorder %v257, 3
        %v291 = vsel %vm287, 1, 0
        %v292 = vsel %vm288, 1, 0
        %v293 = vsel %vm289, 1, 0
        %v294 = vsel %vm290, 1, 0
        %v295 = vcvt.s32.f32 %v291
        %v296 = vcvt.s32.f32 %v292
        %v297 = vcvt.s32.f32 %v293
        %v298 = vcvt.s32.f32 %v294
        %v299 = vmul.f32 %v266, %v295
        %v300 = vmul.f32 %v267, %v296
        %v301 = vmul.f32 %v268, %v297
        %v302 = vmul.f32 %v269, %v298
        %v303 = vsel %vm258, %v299, 0.0
        %v304 = vsel %vm258, %v300, 0.0
        %v305 = vadd.f32 %v303, %v304
        %v306 = vsel %vm258, %v301, 0.0
        %v307 = vadd.f32 %v305, %v306
        %v308 = vsel %vm258, %v302, 0.0
        %v309 = vadd.f32 %v307, %v308
        %v310 = vsub.f32 %v309, %v286
        %v311 = vmul.f32 %v310, 1.442695
        %v312 = vpow.pop %v311
        %v317 = vperm.slane %v241, 0
        %v318 = vperm.slane %v242, 0
        %v319 = vperm.slane %v243, 0
        %v320 = vperm.slane %v244, 0
        %321 = vset.pattern.permute.xlu0 0
        %322 = vperm.xlu0 %321, %v317
        %v323 = vpop.permute.xlu0 %322
        %325 = vset.pattern.permute.xlu0 0
        %326 = vperm.xlu0 %325, %v318
        %v327 = vpop.permute.xlu0 %326
        %329 = vset.pattern.permute.xlu0 0
        %330 = vperm.xlu0 %329, %v319
        %v331 = vpop.permute.xlu0 %330
        %333 = vset.pattern.permute.xlu0 0
        %334 = vperm.xlu0 %333, %v320
        %v335 = vpop.permute.xlu0 %334
        %v337 = vmul.f32 %v323, %v295
        %v338 = vmul.f32 %v327, %v296
        %v339 = vmul.f32 %v331, %v297
        %v340 = vmul.f32 %v335, %v298
        %v341 = vsel %vm258, %v337, 0.0
        %v342 = vsel %vm258, %v338, 0.0
        %v343 = vadd.f32 %v341, %v342
        %v344 = vsel %vm258, %v339, 0.0
        %v345 = vadd.f32 %v343, %v344
        %v346 = vsel %vm258, %v340, 0.0
        %v347 = vadd.f32 %v345, %v346
        %v348 = vsub.f32 1.0, %v312
        %v349 = vmax.f32 %v348, 0.0
        %v350 = vmul.f32 %v349, %v349
        %v351 = vsub.f32 0.0, %v350
        %v352 = vmul.f32 %v310, %v347
        %v353 = vmul.f32 %v351, %v352
        %v354 = vsel %vm250, %v353, 0.0
        %v355 = vsel %vm258, %v354, 0.0
        %356 = vadd.xlane.f32.xlu0 %v355
        %v357 = vpop.xlane.xlu0 %356
        %v358 = vrot.slane %v357, 4
        %v359 = vadd.f32 %v357, %v358
        %v360 = vrot.slane %v359, 2
        %v361 = vadd.f32 %v359, %v360
        %v362 = vrot.slane %v361, 1
        %v363 = vadd.f32 %v361, %v362
        %s364 = vtos %v363
        %v365 = vlaneseq
        %v366 = vand.u32 %v365, 127
        %vm367 = vcmp.eq.s32.totalorder %v246, 0
        %vm368 = vcmp.eq.s32.totalorder %v366, 0
        %vm369 = vmand %vm367, %vm368
        %v370 = vstv %s364
        %v371 = vsel %vm369, %v370, 0.0
        %372 = vst [vmem:[%s228] sm:$0xff] %v371
        %s373 = sand.u32 %s119, 1
        %s374 = scalar_lea.sflag [#allocation4], %s373
        %s375 = sand.u32 %s119, 1
        %s376 = smul.addr %s375, 8
        %s377 = scalar_lea.vmem [#allocation5], %s376
        // Predicated region
        $region37: #{tpu_custom_call.1} parent=31 // pred_check
          %p378 = pneg %p129
        $region38: #{tpu_custom_call.1} parent=31 // pred_check_branch
          %380 = sbr.rel (%p378) target = $region40
        $region39: #{tpu_custom_call.1} parent=31 // pred_region
          %382 = vsyncadd %s374, 0
          %s383 = sadd.s32 %s25, %s24
          %s384 = smul.addr %s383, 8
          %s385 = scalar_lea.hbm %s3, %s384
          %s387 = sshll.u32 %s377, 4
          %s388 = int_to_ptr.vmem [resolvable:$true] %s387
          %s389 = sshll.u32 %s385, 4
          %s390 = int_to_ptr.hbm [resolvable:$true] %s389
          %392 = dma.vmem_to_hbm [thread:$0]  %s388, 128, %s390, %s374
        $region40: #{tpu_custom_call.1} parent=31 // pred_fallthru
          _
      $region32: #{tpu_custom_call.1} parent=5 // pred_fallthru
        _
      %p393 = scmp.le.s32.totalorder 2, %s15
      // Predicated region
      $region41: #{tpu_custom_call.1} parent=5 // pred_check
        %p394 = pneg %p393
      $region42: #{tpu_custom_call.1} parent=5 // pred_check_branch
        %396 = sbr.rel (%p394) target = $region44
      $region43: #{tpu_custom_call.1} parent=5 // pred_region
        %s397 = ssub.s32 %s15, 2
        // Predicated region
        $region45: #{tpu_custom_call.1} parent=43 // pred_check
          %p398 = pneg %p135
        $region46: #{tpu_custom_call.1} parent=43 // pred_check_branch
          %400 = sbr.rel (%p398) target = $region48
        $region47: #{tpu_custom_call.1} parent=43 // pred_region
          %s401 = sand.u32 %s120, 1
          %s402 = scalar_lea.sflag [#allocation4], %s401
          %s403 = sand.u32 %s120, 1
          %s404 = smul.addr %s403, 8
          %s405 = scalar_lea.vmem [#allocation5], %s404
          %407 = dma.done %s402, 128
        $region48: #{tpu_custom_call.1} parent=43 // pred_fallthru
          _
      $region44: #{tpu_custom_call.1} parent=5 // pred_fallthru
        _
    $region6: #{tpu_custom_call.1} parent=1 // loop_footer
      %s19 = sadd.s32 1, %s15
    $region7: #{tpu_custom_call.1} parent=1 // loop_footer_branch
      %14 = sbr.rel target = $region3
    $region8: #{tpu_custom_call.1} parent=1 // loop_exit
      _
    %408 = vsyncpa [#allocation3], 1
    %s409 = scalar_lea.sflag [#allocation3], 1
    %410 = vsyncpa %s409, 1
    %411 = vsyncpa [#allocation4], 1
    %s412 = scalar_lea.sflag [#allocation4], 1
    %413 = vsyncpa %s412, 1

</llo_original>
